<compile_context>
chip_gen: v7x
topology: tpu7x:2x2x1
jax: 0.10.0
libtpu: 0.0.40
codegen_flags: <defaults>
</compile_context>

<pallas_src>
import functools

import jax
import jax.numpy as jnp
from jax.experimental import pallas as pl
from jax.experimental.pallas import tpu as pltpu


def _softmax_logsoftmax(x):
    """Return (p, log_p) with a single exp pass over the tile (f32)."""
    m = jnp.max(x, axis=-1, keepdims=True)
    z = x - m
    e = jnp.exp(z)                                   # single EUP pass
    s = jnp.sum(e, axis=-1, keepdims=True)
    log_p = z - jnp.log(s)
    p = e * (1.0 / s)                                # exact per-row reciprocal
    return p, log_p


def _loss_kernel(out_ref, drop_ref, img_ref, tgt_ref, loss_ref,
                 kl_acc_ref, ce_acc_ref, *,
                 batch, tile_rows, kl_scale_half, ce_scale):
    c = pl.program_id(0)                 # core (parallel) axis
    j = pl.program_id(1)                 # tile (reduction) axis
    nj = pl.num_programs(1)

    @pl.when(j == 0)
    def _init():
        kl_acc_ref[...] = jnp.zeros_like(kl_acc_ref)
        ce_acc_ref[...] = jnp.zeros_like(ce_acc_ref)

    # Row-validity mask: handles the ragged batch tail and the clamped
    # overshoot tiles of the last core -- no host-side padding needed.
    t = c * nj + j                                           # global tile idx
    row_ids = t * tile_rows + jax.lax.broadcasted_iota(
        jnp.int32, (tile_rows, 1), 0)
    vmask = row_ids < batch                                  # (TB, 1) bool

    zero = jnp.float32(0.0)
    logits = jnp.where(vmask, out_ref[...].astype(jnp.float32), zero)
    a = jnp.where(vmask, drop_ref[...].astype(jnp.float32), zero)   # drop
    b = jnp.where(vmask, img_ref[...].astype(jnp.float32), zero)    # img

    # --- fused symmetric KL partial: sum((q - p) * (log_q - log_p)) -------
    # Masked rows have a == b == 0  ->  p == q exactly  ->  zero contribution.
    p, log_p = _softmax_logsoftmax(a)        # softmax(text_img_drop)
    q, log_q = _softmax_logsoftmax(b)        # softmax(text_img)
    kl_row = jnp.sum((q - p) * (log_q - log_p), axis=-1, keepdims=True)

    # --- cross-entropy partial (one-hot compare on VPU; no MXU, no gather) -
    m = jnp.max(logits, axis=-1, keepdims=True)
    z = logits - m
    log_sm = z - jnp.log(jnp.sum(jnp.exp(z), axis=-1, keepdims=True))
    tb, ncls = logits.shape
    col = jax.lax.broadcasted_iota(jnp.int32, (tb, ncls), 1)
    onehot = jnp.where(vmask & (col == tgt_ref[...]),
                       jnp.float32(1.0), jnp.float32(0.0))
    ce_row = -jnp.sum(onehot * log_sm, axis=-1, keepdims=True)

    # Deferred collapse: accumulate per-row partials in VMEM each step.
    kl_acc_ref[...] = kl_acc_ref[...] + kl_row
    ce_acc_ref[...] = ce_acc_ref[...] + ce_row

    @pl.when(j == nj - 1)
    def _finalize():
        loss_ref[0, 0] = (kl_scale_half * jnp.sum(kl_acc_ref[...])
                          + ce_scale * jnp.sum(ce_acc_ref[...]))


def _vmem_capacity_bytes():
    try:
        info = pltpu.get_tpu_info()
        cap = getattr(info, "vmem_capacity_bytes", None)
        if cap:
            return int(cap)
    except Exception:
        pass
    return 64 << 20          # conservative default (v7x has 64 MiB per TC)


def secif_loss(output, text_img_drop, text_img, targets, *,
               tb=512, num_cores=2):
    """output:[B,C], text_img_drop/text_img:[B,D] (any float dtype),
    targets:[B] int."""
    B, C = output.shape
    D = text_img.shape[1]
    assert text_img_drop.shape == (B, D)
    assert targets.shape == (B,)

    # Targets stay int32; tiny (B,1) operand, everything else untouched.
    targets2d = targets.astype(jnp.int32).reshape(B, 1)

    def isz(x):
        return jnp.dtype(x.dtype).itemsize

    # --- generation-aware tile sizing -------------------------------------
    vmem_cap = _vmem_capacity_bytes()
    budget = int(vmem_cap * 0.4)            # double-buffered input tiles
    row_bytes = (C * isz(output)
                 + D * isz(text_img_drop)
                 + D * isz(text_img)
                 + 128 * 4)                 # (TB,1) int32 pads to 128 lanes
    sub = 16 if min(isz(output), isz(text_img_drop), isz(text_img)) < 4 else 8
    tb_budget = max(sub, budget // (2 * row_bytes))
    if B < sub:
        TB = B                              # block equals the full batch dim
    else:
        TB = max(sub, (min(int(tb), tb_budget, B) // sub) * sub)

    num_tiles = pl.cdiv(B, TB)
    nc = max(1, min(int(num_cores), num_tiles))
    tiles_per_core = pl.cdiv(num_tiles, nc)

    def row_block(c, j):
        # Clamp overshoot tiles of the last core; they are fully row-masked.
        return (jnp.minimum(c * tiles_per_core + j, num_tiles - 1), 0)

    kernel = functools.partial(
        _loss_kernel,
        batch=B,
        tile_rows=TB,
        kl_scale_half=0.5 / float(B * D),   # normalize by true element count
        ce_scale=1.0 / float(B),            # normalize by true batch size
    )

    per_step_bytes = TB * row_bytes
    scratch_bytes = 2 * TB * 128 * 4        # two (TB,1) f32 accs, lane-padded
    vmem_limit = max(2 * per_step_bytes + scratch_bytes + (2 << 20), 16 << 20)
    vmem_limit = min(vmem_limit, int(vmem_cap * 0.75))

    partials = pl.pallas_call(
        kernel,
        out_shape=jax.ShapeDtypeStruct((nc, 1), jnp.float32),
        grid=(nc, tiles_per_core),
        in_specs=[
            pl.BlockSpec((TB, C), row_block),
            pl.BlockSpec((TB, D), row_block),
            pl.BlockSpec((TB, D), row_block),
            pl.BlockSpec((TB, 1), row_block),
        ],
        out_specs=pl.BlockSpec((1, 1), lambda c, j: (c, 0),
                               memory_space=pltpu.SMEM),
        scratch_shapes=[pltpu.VMEM((TB, 1), jnp.float32),
                        pltpu.VMEM((TB, 1), jnp.float32)],
        compiler_params=pltpu.CompilerParams(
            dimension_semantics=("parallel", "arbitrary"),
            vmem_limit_bytes=int(vmem_limit),
        ),
    )(output, text_img_drop, text_img, targets2d)

    # Sum the per-core partial losses (already normalized in-kernel).
    return jnp.sum(partials)


def _reference_loss(output, text_img_drop, text_img, targets):
    # Pure-JAX reference of the PyTorch semantics (f32 math).
    output = output.astype(jnp.float32)
    text_img_drop = text_img_drop.astype(jnp.float32)
    text_img = text_img.astype(jnp.float32)
    log_p = jax.nn.log_softmax(text_img_drop, axis=-1)
    log_q = jax.nn.log_softmax(text_img, axis=-1)
    p, q = jnp.exp(log_p), jnp.exp(log_q)
    kl1 = jnp.mean(q * (log_q - log_p))
    kl2 = jnp.mean(p * (log_p - log_q))
    kl_loss = 0.5 * (kl1 + kl2)
    log_sm = jax.nn.log_softmax(output, axis=-1)
    ce = -jnp.mean(jnp.take_along_axis(log_sm, targets[:, None], axis=-1))
    return kl_loss + ce


if __name__ == "__main__":
    key = jax.random.PRNGKey(0)

    # Case 1: small f32 batch, single tile / single core.
    k1, k2, k3, k4 = jax.random.split(key, 4)
    B, C, D = 8, 16, 128
    output = jax.random.normal(k1, (B, C), dtype=jnp.float32)
    text_img_drop = jax.random.normal(k2, (B, D), dtype=jnp.float32)
    text_img = jax.random.normal(k3, (B, D), dtype=jnp.float32)
    targets = jax.random.randint(k4, (B,), 0, C, dtype=jnp.int32)

    loss = secif_loss(output, text_img_drop, text_img, targets)
    jax.block_until_ready(loss)
    ref = _reference_loss(output, text_img_drop, text_img, targets)
    assert jnp.allclose(loss, ref, rtol=1e-5, atol=1e-5), (loss, ref)

    # Case 2: batch not a multiple of the tile -> ragged tail is masked
    # in-kernel (no padding), and the 2-core split has a clamped extra tile.
    k5, k6, k7, k8 = jax.random.split(jax.random.PRNGKey(1), 4)
    B2 = 20
    output2 = jax.random.normal(k5, (B2, C), dtype=jnp.float32)
    drop2 = jax.random.normal(k6, (B2, D), dtype=jnp.float32)
    img2 = jax.random.normal(k7, (B2, D), dtype=jnp.float32)
    targets2 = jax.random.randint(k8, (B2,), 0, C, dtype=jnp.int32)

    loss2 = secif_loss(output2, drop2, img2, targets2, tb=8)  # 3 tiles, 2 cores
    jax.block_until_ready(loss2)
    ref2 = _reference_loss(output2, drop2, img2, targets2)
    assert jnp.allclose(loss2, ref2, rtol=1e-5, atol=1e-5), (loss2, ref2)

    # Case 3: bf16 inputs streamed natively (no wrapper f32 cast), 2 tiles.
    k9, k10, k11, k12 = jax.random.split(jax.random.PRNGKey(2), 4)
    B3 = 32
    output3 = jax.random.normal(k9, (B3, C), dtype=jnp.bfloat16)
    drop3 = jax.random.normal(k10, (B3, D), dtype=jnp.bfloat16)
    img3 = jax.random.normal(k11, (B3, D), dtype=jnp.bfloat16)
    targets3 = jax.random.randint(k12, (B3,), 0, C, dtype=jnp.int32)

    loss3 = secif_loss(output3, drop3, img3, targets3, tb=16)
    jax.block_until_ready(loss3)
    ref3 = _reference_loss(output3, drop3, img3, targets3)
    assert jnp.allclose(loss3, ref3, rtol=1e-4, atol=1e-4), (loss3, ref3)

    print("KERNEL_OK")
</pallas_src>

<mosaic_0001>
module attributes {stable_mosaic.version = 11 : i64} {
  func.func @_loss_kernel(%arg0: i32, %arg1: i32, %arg2: memref<8x16xf32, #tpu.memory_space<vmem>>, %arg3: memref<8x128xf32, #tpu.memory_space<vmem>>, %arg4: memref<8x128xf32, #tpu.memory_space<vmem>>, %arg5: memref<8x1xi32, #tpu.memory_space<vmem>>, %arg6: memref<1x1xf32, #tpu.memory_space<smem>>, %arg7: memref<8x1xf32, #tpu.memory_space<vmem>>, %arg8: memref<8x1xf32, #tpu.memory_space<vmem>>) attributes {dimension_semantics = [#tpu.dimension_semantics<parallel>, #tpu.dimension_semantics<arbitrary>], iteration_bounds = array<i64: 1, 1>, scalar_prefetch = 0 : i64, scratch_operands = 2 : i64, tpu.core_type = #tpu.core_type<tc>, window_params = [{transform_indices = @transform_0, window_bounds = array<i64: 8, 16>}, {transform_indices = @transform_1, window_bounds = array<i64: 8, 128>}, {transform_indices = @transform_2, window_bounds = array<i64: 8, 128>}, {transform_indices = @transform_3, window_bounds = array<i64: 8, 1>}, {transform_indices = @transform_4, window_bounds = array<i64: 1, 1>}]} {
    %c0_i32 = arith.constant 0 : i32
    %0 = arith.cmpi eq, %arg1, %c0_i32 : i32
    %1 = arith.extui %0 : i1 to i32
    %c0_i32_0 = arith.constant 0 : i32
    %2 = arith.cmpi ne, %1, %c0_i32_0 : i32
    scf.if %2 {
      %cst_34 = arith.constant 0.000000e+00 : f32
      %92 = vector.broadcast %cst_34 : f32 to vector<8x1xf32>
      %c0_35 = arith.constant 0 : index
      %c0_36 = arith.constant 0 : index
      %93 = vector.load %arg7[%c0_35, %c0_36] : memref<8x1xf32, #tpu.memory_space<vmem>>, vector<8x1xf32>
      tpu.vector_store %arg7[%c0_35, %c0_36], %92 {strides = array<i32>} : memref<8x1xf32, #tpu.memory_space<vmem>>, vector<8x1xf32>,
      %cst_37 = arith.constant 0.000000e+00 : f32
      %94 = vector.broadcast %cst_37 : f32 to vector<8x1xf32>
      %c0_38 = arith.constant 0 : index
      %c0_39 = arith.constant 0 : index
      %95 = vector.load %arg8[%c0_38, %c0_39] : memref<8x1xf32, #tpu.memory_space<vmem>>, vector<8x1xf32>
      tpu.vector_store %arg8[%c0_38, %c0_39], %94 {strides = array<i32>} : memref<8x1xf32, #tpu.memory_space<vmem>>, vector<8x1xf32>,
    } else {
    }
    %c1_i32 = arith.constant 1 : i32
    %3 = arith.muli %arg0, %c1_i32 : i32
    %4 = arith.addi %3, %arg1 : i32
    %c8_i32 = arith.constant 8 : i32
    %5 = arith.muli %4, %c8_i32 : i32
    %6 = tpu.iota {dimensions = array<i32: 0>} : vector<8x1xi32>
    %7 = vector.broadcast %5 : i32 to vector<8x1xi32>
    %8 = arith.addi %7, %6 : vector<8x1xi32>
    %c8_i32_1 = arith.constant 8 : i32
    %9 = vector.broadcast %c8_i32_1 : i32 to vector<8x1xi32>
    %10 = arith.cmpi slt, %8, %9 : vector<8x1xi32>
    %c0 = arith.constant 0 : index
    %c0_2 = arith.constant 0 : index
    %11 = vector.load %arg2[%c0, %c0_2] : memref<8x16xf32, #tpu.memory_space<vmem>>, vector<8x16xf32>
    %cst = arith.constant 0.000000e+00 : f32
    %12 = vector.shape_cast %10 : vector<8x1xi1> to vector<8x1xi1>
    %13 = vector.broadcast %12 : vector<8x1xi1> to vector<8x16xi1>
    %14 = vector.broadcast %cst : f32 to vector<8x16xf32>
    %15 = arith.select %13, %11, %14 : vector<8x16xi1>, vector<8x16xf32>
    %c0_3 = arith.constant 0 : index
    %c0_4 = arith.constant 0 : index
    %16 = vector.load %arg3[%c0_3, %c0_4] : memref<8x128xf32, #tpu.memory_space<vmem>>, vector<8x128xf32>
    %cst_5 = arith.constant 0.000000e+00 : f32
    %17 = vector.shape_cast %10 : vector<8x1xi1> to vector<8x1xi1>
    %18 = vector.broadcast %17 : vector<8x1xi1> to vector<8x128xi1>
    %19 = vector.broadcast %cst_5 : f32 to vector<8x128xf32>
    %20 = arith.select %18, %16, %19 : vector<8x128xi1>, vector<8x128xf32>
    %c0_6 = arith.constant 0 : index
    %c0_7 = arith.constant 0 : index
    %21 = vector.load %arg4[%c0_6, %c0_7] : memref<8x128xf32, #tpu.memory_space<vmem>>, vector<8x128xf32>
    %cst_8 = arith.constant 0.000000e+00 : f32
    %22 = vector.shape_cast %10 : vector<8x1xi1> to vector<8x1xi1>
    %23 = vector.broadcast %22 : vector<8x1xi1> to vector<8x128xi1>
    %24 = vector.broadcast %cst_8 : f32 to vector<8x128xf32>
    %25 = arith.select %23, %21, %24 : vector<8x128xi1>, vector<8x128xf32>
    %cst_9 = arith.constant dense<0xFF800000> : vector<8xf32>
    %26 = vector.multi_reduction <maximumf>, %20, %cst_9 [1] : vector<8x128xf32> to vector<8xf32>
    %27 = vector.shape_cast %26 : vector<8xf32> to vector<8x1xf32>
    %28 = vector.broadcast %27 : vector<8x1xf32> to vector<8x128xf32>
    %29 = arith.subf %20, %28 : vector<8x128xf32>
    %30 = math.exp %29 : vector<8x128xf32>
    %cst_10 = arith.constant dense<0.000000e+00> : vector<8xf32>
    %31 = vector.multi_reduction <add>, %30, %cst_10 [1] : vector<8x128xf32> to vector<8xf32>
    %32 = vector.shape_cast %31 : vector<8xf32> to vector<8x1xf32>
    %33 = math.log %32 : vector<8x1xf32>
    %34 = vector.broadcast %33 : vector<8x1xf32> to vector<8x128xf32>
    %35 = arith.subf %29, %34 : vector<8x128xf32>
    %cst_11 = arith.constant 1.000000e+00 : f32
    %36 = vector.broadcast %cst_11 : f32 to vector<8x1xf32>
    %37 = arith.divf %36, %32 : vector<8x1xf32>
    %38 = vector.broadcast %37 : vector<8x1xf32> to vector<8x128xf32>
    %39 = arith.mulf %30, %38 : vector<8x128xf32>
    %cst_12 = arith.constant dense<0xFF800000> : vector<8xf32>
    %40 = vector.multi_reduction <maximumf>, %25, %cst_12 [1] : vector<8x128xf32> to vector<8xf32>
    %41 = vector.shape_cast %40 : vector<8xf32> to vector<8x1xf32>
    %42 = vector.broadcast %41 : vector<8x1xf32> to vector<8x128xf32>
    %43 = arith.subf %25, %42 : vector<8x128xf32>
    %44 = math.exp %43 : vector<8x128xf32>
    %cst_13 = arith.constant dense<0.000000e+00> : vector<8xf32>
    %45 = vector.multi_reduction <add>, %44, %cst_13 [1] : vector<8x128xf32> to vector<8xf32>
    %46 = vector.shape_cast %45 : vector<8xf32> to vector<8x1xf32>
    %47 = math.log %46 : vector<8x1xf32>
    %48 = vector.broadcast %47 : vector<8x1xf32> to vector<8x128xf32>
    %49 = arith.subf %43, %48 : vector<8x128xf32>
    %cst_14 = arith.constant 1.000000e+00 : f32
    %50 = vector.broadcast %cst_14 : f32 to vector<8x1xf32>
    %51 = arith.divf %50, %46 : vector<8x1xf32>
    %52 = vector.broadcast %51 : vector<8x1xf32> to vector<8x128xf32>
    %53 = arith.mulf %44, %52 : vector<8x128xf32>
    %54 = arith.subf %53, %39 : vector<8x128xf32>
    %55 = arith.subf %49, %35 : vector<8x128xf32>
    %56 = arith.mulf %54, %55 : vector<8x128xf32>
    %cst_15 = arith.constant dense<0.000000e+00> : vector<8xf32>
    %57 = vector.multi_reduction <add>, %56, %cst_15 [1] : vector<8x128xf32> to vector<8xf32>
    %58 = vector.shape_cast %57 : vector<8xf32> to vector<8x1xf32>
    %cst_16 = arith.constant dense<0xFF800000> : vector<8xf32>
    %59 = vector.multi_reduction <maximumf>, %15, %cst_16 [1] : vector<8x16xf32> to vector<8xf32>
    %60 = vector.shape_cast %59 : vector<8xf32> to vector<8x1xf32>
    %61 = vector.broadcast %60 : vector<8x1xf32> to vector<8x16xf32>
    %62 = arith.subf %15, %61 : vector<8x16xf32>
    %63 = math.exp %62 : vector<8x16xf32>
    %cst_17 = arith.constant dense<0.000000e+00> : vector<8xf32>
    %64 = vector.multi_reduction <add>, %63, %cst_17 [1] : vector<8x16xf32> to vector<8xf32>
    %65 = vector.shape_cast %64 : vector<8xf32> to vector<8x1xf32>
    %66 = math.log %65 : vector<8x1xf32>
    %67 = vector.broadcast %66 : vector<8x1xf32> to vector<8x16xf32>
    %68 = arith.subf %62, %67 : vector<8x16xf32>
    %69 = tpu.iota {dimensions = array<i32: 1>} : vector<8x16xi32>
    %c0_18 = arith.constant 0 : index
    %c0_19 = arith.constant 0 : index
    %70 = vector.load %arg5[%c0_18, %c0_19] : memref<8x1xi32, #tpu.memory_space<vmem>>, vector<8x1xi32>
    %71 = vector.broadcast %70 : vector<8x1xi32> to vector<8x16xi32>
    %72 = arith.cmpi eq, %69, %71 : vector<8x16xi32>
    %73 = vector.broadcast %10 : vector<8x1xi1> to vector<8x16xi1>
    %74 = arith.andi %73, %72 : vector<8x16xi1>
    %cst_20 = arith.constant 1.000000e+00 : f32
    %cst_21 = arith.constant 0.000000e+00 : f32
    %75 = vector.broadcast %cst_20 : f32 to vector<8x16xf32>
    %76 = vector.broadcast %cst_21 : f32 to vector<8x16xf32>
    %77 = arith.select %74, %75, %76 : vector<8x16xi1>, vector<8x16xf32>
    %78 = arith.mulf %77, %68 : vector<8x16xf32>
    %cst_22 = arith.constant dense<0.000000e+00> : vector<8xf32>
    %79 = vector.multi_reduction <add>, %78, %cst_22 [1] : vector<8x16xf32> to vector<8xf32>
    %80 = vector.shape_cast %79 : vector<8xf32> to vector<8x1xf32>
    %cst_23 = arith.constant 0.000000e+00 : f32
    %81 = vector.broadcast %cst_23 : f32 to vector<8x1xf32>
    %82 = arith.subf %81, %80 : vector<8x1xf32>
    %c0_24 = arith.constant 0 : index
    %c0_25 = arith.constant 0 : index
    %83 = vector.load %arg7[%c0_24, %c0_25] : memref<8x1xf32, #tpu.memory_space<vmem>>, vector<8x1xf32>
    %84 = arith.addf %83, %58 : vector<8x1xf32>
    %c0_26 = arith.constant 0 : index
    %c0_27 = arith.constant 0 : index
    %85 = vector.load %arg7[%c0_26, %c0_27] : memref<8x1xf32, #tpu.memory_space<vmem>>, vector<8x1xf32>
    tpu.vector_store %arg7[%c0_26, %c0_27], %84 {strides = array<i32>} : memref<8x1xf32, #tpu.memory_space<vmem>>, vector<8x1xf32>,
    %c0_28 = arith.constant 0 : index
    %c0_29 = arith.constant 0 : index
    %86 = vector.load %arg8[%c0_28, %c0_29] : memref<8x1xf32, #tpu.memory_space<vmem>>, vector<8x1xf32>
    %87 = arith.addf %86, %82 : vector<8x1xf32>
    %c0_30 = arith.constant 0 : index
    %c0_31 = arith.constant 0 : index
    %88 = vector.load %arg8[%c0_30, %c0_31] : memref<8x1xf32, #tpu.memory_space<vmem>>, vector<8x1xf32>
    tpu.vector_store %arg8[%c0_30, %c0_31], %87 {strides = array<i32>} : memref<8x1xf32, #tpu.memory_space<vmem>>, vector<8x1xf32>,
    %c0_i32_32 = arith.constant 0 : i32
    %89 = arith.cmpi eq, %arg1, %c0_i32_32 : i32
    %90 = arith.extui %89 : i1 to i32
    %c0_i32_33 = arith.constant 0 : i32
    %91 = arith.cmpi ne, %90, %c0_i32_33 : i32
    scf.if %91 {
      %c0_34 = arith.constant 0 : index
      %c0_35 = arith.constant 0 : index
      %92 = vector.load %arg7[%c0_34, %c0_35] : memref<8x1xf32, #tpu.memory_space<vmem>>, vector<8x1xf32>
      %93 = vector.shape_cast %92 : vector<8x1xf32> to vector<1x8x1xf32>
      %cst_36 = arith.constant dense<0.000000e+00> : vector<1xf32>
      %94 = vector.multi_reduction <add>, %93, %cst_36 [1, 2] : vector<1x8x1xf32> to vector<1xf32>
      %95 = vector.shape_cast %94 : vector<1xf32> to vector<1x1x1xf32>
      %96 = vector.extract %95[0, 0, 0] : f32 from vector<1x1x1xf32>
      %cst_37 = arith.constant 4.8828125E-4 : f32
      %97 = arith.mulf %cst_37, %96 : f32
      %c0_38 = arith.constant 0 : index
      %c0_39 = arith.constant 0 : index
      %98 = vector.load %arg8[%c0_38, %c0_39] : memref<8x1xf32, #tpu.memory_space<vmem>>, vector<8x1xf32>
      %99 = vector.shape_cast %98 : vector<8x1xf32> to vector<1x8x1xf32>
      %cst_40 = arith.constant dense<0.000000e+00> : vector<1xf32>
      %100 = vector.multi_reduction <add>, %99, %cst_40 [1, 2] : vector<1x8x1xf32> to vector<1xf32>
      %101 = vector.shape_cast %100 : vector<1xf32> to vector<1x1x1xf32>
      %102 = vector.extract %101[0, 0, 0] : f32 from vector<1x1x1xf32>
      %cst_41 = arith.constant 1.250000e-01 : f32
      %103 = arith.mulf %cst_41, %102 : f32
      %104 = arith.addf %97, %103 : f32
      %c0_42 = arith.constant 0 : index
      %c0_43 = arith.constant 0 : index
      %105 = memref.load %arg6[%c0_42, %c0_43] : memref<1x1xf32, #tpu.memory_space<smem>>
      memref.store %104, %arg6[%c0_42, %c0_43] : memref<1x1xf32, #tpu.memory_space<smem>>
    } else {
    }
    return
  }
  func.func @transform_0(%arg0: i32, %arg1: i32) -> (i32, i32) {
    %c1_i32 = arith.constant 1 : i32
    %0 = arith.muli %arg0, %c1_i32 : i32
    %1 = arith.addi %0, %arg1 : i32
    %c0_i32 = arith.constant 0 : i32
    %2 = arith.minsi %1, %c0_i32 : i32
    %c0_i32_0 = arith.constant 0 : i32
    %c0_i32_1 = arith.constant 0 : i32
    return %2, %c0_i32_0 : i32, i32
  }
  func.func @transform_1(%arg0: i32, %arg1: i32) -> (i32, i32) {
    %c1_i32 = arith.constant 1 : i32
    %0 = arith.muli %arg0, %c1_i32 : i32
    %1 = arith.addi %0, %arg1 : i32
    %c0_i32 = arith.constant 0 : i32
    %2 = arith.minsi %1, %c0_i32 : i32
    %c0_i32_0 = arith.constant 0 : i32
    %c0_i32_1 = arith.constant 0 : i32
    return %2, %c0_i32_0 : i32, i32
  }
  func.func @transform_2(%arg0: i32, %arg1: i32) -> (i32, i32) {
    %c1_i32 = arith.constant 1 : i32
    %0 = arith.muli %arg0, %c1_i32 : i32
    %1 = arith.addi %0, %arg1 : i32
    %c0_i32 = arith.constant 0 : i32
    %2 = arith.minsi %1, %c0_i32 : i32
    %c0_i32_0 = arith.constant 0 : i32
    %c0_i32_1 = arith.constant 0 : i32
    return %2, %c0_i32_0 : i32, i32
  }
  func.func @transform_3(%arg0: i32, %arg1: i32) -> (i32, i32) {
    %c1_i32 = arith.constant 1 : i32
    %0 = arith.muli %arg0, %c1_i32 : i32
    %1 = arith.addi %0, %arg1 : i32
    %c0_i32 = arith.constant 0 : i32
    %2 = arith.minsi %1, %c0_i32 : i32
    %c0_i32_0 = arith.constant 0 : i32
    %c0_i32_1 = arith.constant 0 : i32
    return %2, %c0_i32_0 : i32, i32
  }
  func.func @transform_4(%arg0: i32, %arg1: i32) -> (i32, i32) {
    %c0_i32 = arith.constant 0 : i32
    %c0_i32_0 = arith.constant 0 : i32
    return %arg0, %c0_i32 : i32, i32
  }
}

</mosaic_0001>

<llo_original>
// kernel: tpu_custom_call.1
$region0: #{tpu_custom_call.1}
  #allocation0 [shape = 'u32[]', space=smem, size = 0x4, offset = 0x4, fixed_abs, tag = 'smem constant byte address 0x4 - core index']
  #allocation1 [shape = 'u32[144,128]{1,0:T(1,128)}', space=vmem, size = 0x12000, scoped, tag = 'internal scratch']
  #allocation2 [shape = 'f32[8,1]{1,0:T(8,128)}', space=vmem, size = 0x1000, scoped, tag = 'scratch operand']
  #allocation3 [shape = 'f32[8,1]{1,0:T(8,128)}', space=vmem, size = 0x1000, scoped, tag = 'scratch operand']
  %s0 = inlined_call_operand.vmem [shape: f32[8,16], index: 0, kind: input, shape index: {}]
  %s1 = inlined_call_operand.hbm [shape: f32[8,128], index: 1, kind: input, shape index: {}]
  %s2 = inlined_call_operand.vmem [shape: f32[8,128], index: 2, kind: input, shape index: {}]
  %s3 = inlined_call_operand.vmem [shape: s32[8,1], index: 3, kind: input, shape index: {}]
  %s4 = inlined_call_operand.hbm [shape: f32[1,1], index: 4, kind: output, shape index: {}]
  %s5 = sld [smem:[#allocation0]]
  $region38: #{tpu_custom_call.1} parent=0
    _
  %s7 = ssub.s32 1, %s5
  %s8 = scalar_select 0, %s7, %s5
  $region1: #{tpu_custom_call.1} parent=0
    #allocation4 [shape = 'u8[4096]{0}', space=vmem, size = 0x1000, scoped, tag = 'input window, operand 1, single buffered']
    #allocation5 [shape = 's32[1]{0}', space=sflag, size = 0x4, scoped, tag = 'scoped memory for tpu_custom_call.1']
    #allocation6 [shape = 's32[1]{0}', space=sflag, size = 0x4, scoped, tag = 'scoped memory for tpu_custom_call.1']
    #allocation7 [shape = 'u8[512]{0}', space=smem, size = 0x200, scoped, tag = 'output window, operand 0, single buffered']
    %9 = vsyncpa [#allocation5], 0
    %10 = vsyncpa [#allocation6], 0
    // Predicated region
    $region2: #{tpu_custom_call.1} parent=1 // pred_check
      _
    $region3: #{tpu_custom_call.1} parent=1 // pred_check_branch
      %12 = sbr.rel (0) target = $region5
    $region4: #{tpu_custom_call.1} parent=1 // pred_region
      %s13 = sadd.s32 0, 0
      %p14 = scmp.lt.s32.totalorder %s13, 0
      %s15 = scalar_select %p14, %s13, 0
      %p16 = scmp.lt.s32.totalorder %s15, 0
      %s17 = scalar_select %p16, %s15, 0
      %s18 = smul.addr %s17, 8
      %s19 = scalar_lea.vmem %s0, %s18
      %s20 = sadd.s32 0, 0
      %p21 = scmp.lt.s32.totalorder %s20, 0
      %s22 = scalar_select %p21, %s20, 0
    $region5: #{tpu_custom_call.1} parent=1 // pred_fallthru
      _
    // Predicated region
    $region6: #{tpu_custom_call.1} parent=1 // pred_check
      _
    $region7: #{tpu_custom_call.1} parent=1 // pred_check_branch
      %24 = sbr.rel (0) target = $region9
    $region8: #{tpu_custom_call.1} parent=1 // pred_region
      %s25 = sadd.s32 0, 0
      %p26 = scmp.lt.s32.totalorder %s25, 0
      %s27 = scalar_select %p26, %s25, 0
      %s29 = ssub.s32 128, 128
      %30 = vsyncadd [#allocation5], %s29
      %s31 = smul.addr %s27, 128
      %s32 = scalar_lea.hbm %s1, %s31
      %s34 = sshll.u32 [#allocation4], 4
      %s35 = int_to_ptr.vmem [resolvable:$true] %s34
      %37 = dma.hbm_to_vmem [thread:$0]  %s32, 128, %s35, [#allocation5]
    $region9: #{tpu_custom_call.1} parent=1 // pred_fallthru
      _
    // Predicated region
    $region10: #{tpu_custom_call.1} parent=1 // pred_check
      _
    $region11: #{tpu_custom_call.1} parent=1 // pred_check_branch
      %39 = sbr.rel (0) target = $region13
    $region12: #{tpu_custom_call.1} parent=1 // pred_region
      %s40 = sadd.s32 0, 0
      %p41 = scmp.lt.s32.totalorder %s40, 0
      %s42 = scalar_select %p41, %s40, 0
      %p43 = scmp.lt.s32.totalorder %s42, 0
      %s44 = scalar_select %p43, %s42, 0
      %s45 = smul.addr %s44, 8
      %s46 = scalar_lea.vmem %s2, %s45
      %s47 = sadd.s32 0, 0
      %p48 = scmp.lt.s32.totalorder %s47, 0
      %s49 = scalar_select %p48, %s47, 0
    $region13: #{tpu_custom_call.1} parent=1 // pred_fallthru
      _
    // Predicated region
    $region14: #{tpu_custom_call.1} parent=1 // pred_check
      _
    $region15: #{tpu_custom_call.1} parent=1 // pred_check_branch
      %51 = sbr.rel (0) target = $region17
    $region16: #{tpu_custom_call.1} parent=1 // pred_region
      %s52 = sadd.s32 0, 0
      %p53 = scmp.lt.s32.totalorder %s52, 0
      %s54 = scalar_select %p53, %s52, 0
      %p55 = scmp.lt.s32.totalorder %s54, 0
      %s56 = scalar_select %p55, %s54, 0
      %s57 = smul.addr %s56, 8
      %s58 = scalar_lea.vmem %s3, %s57
      %s59 = sadd.s32 0, 0
      %p60 = scmp.lt.s32.totalorder %s59, 0
      %s61 = scalar_select %p60, %s59, 0
    $region17: #{tpu_custom_call.1} parent=1 // pred_fallthru
      _
    // Predicated region
    $region18: #{tpu_custom_call.1} parent=1 // pred_check
      _
    $region19: #{tpu_custom_call.1} parent=1 // pred_check_branch
      %63 = sbr.rel (0) target = $region21
    $region20: #{tpu_custom_call.1} parent=1 // pred_region
      %64 = dma.done [#allocation5], 128
    $region21: #{tpu_custom_call.1} parent=1 // pred_fallthru
      _
    %s65 = sadd.s32 0, 0
    %p66 = scmp.lt.s32.totalorder %s65, 0
    %s67 = scalar_select %p66, %s65, 0
    %p68 = scmp.lt.s32.totalorder %s67, 0
    %s69 = scalar_select %p68, %s67, 0
    %s70 = smul.addr %s69, 8
    %s71 = scalar_lea.vmem %s0, %s70
    %s72 = sadd.s32 0, 0
    %p73 = scmp.lt.s32.totalorder %s72, 0
    %s74 = scalar_select %p73, %s72, 0
    %p75 = scmp.lt.s32.totalorder %s74, 0
    %s76 = scalar_select %p75, %s74, 0
    %s77 = smul.addr %s76, 8
    %s78 = scalar_lea.vmem %s2, %s77
    %s79 = sadd.s32 0, 0
    %p80 = scmp.lt.s32.totalorder %s79, 0
    %s81 = scalar_select %p80, %s79, 0
    %p82 = scmp.lt.s32.totalorder %s81, 0
    %s83 = scalar_select %p82, %s81, 0
    %s84 = smul.addr %s83, 8
    %s85 = scalar_lea.vmem %s3, %s84
    %s86 = sadd.s32 0, 0
    %p87 = scmp.lt.s32.totalorder %s86, 0
    %s88 = scalar_select %p87, %s86, 0
    %p89 = scmp.lt.s32.totalorder %s88, 0
    %s90 = scalar_select %p89, %s88, 0
    %s91 = smul.addr %s90, 8
    %s92 = scalar_lea.vmem %s0, %s91
    %s93 = sadd.s32 0, 0
    %p94 = scmp.lt.s32.totalorder %s93, 0
    %s95 = scalar_select %p94, %s93, 0
    %s96 = sadd.s32 0, 0
    %p97 = scmp.lt.s32.totalorder %s96, 0
    %s98 = scalar_select %p97, %s96, 0
    %s99 = sadd.s32 0, 0
    %p100 = scmp.lt.s32.totalorder %s99, 0
    %s101 = scalar_select %p100, %s99, 0
    %p102 = scmp.lt.s32.totalorder %s101, 0
    %s103 = scalar_select %p102, %s101, 0
    %s104 = smul.addr %s103, 8
    %s105 = scalar_lea.vmem %s2, %s104
    %s106 = sadd.s32 0, 0
    %p107 = scmp.lt.s32.totalorder %s106, 0
    %s108 = scalar_select %p107, %s106, 0
    %s109 = sadd.s32 0, 0
    %p110 = scmp.lt.s32.totalorder %s109, 0
    %s111 = scalar_select %p110, %s109, 0
    %p112 = scmp.lt.s32.totalorder %s111, 0
    %s113 = scalar_select %p112, %s111, 0
    %s114 = smul.addr %s113, 8
    %s115 = scalar_lea.vmem %s3, %s114
    %s116 = sadd.s32 0, 0
    %p117 = scmp.lt.s32.totalorder %s116, 0
    %s118 = scalar_select %p117, %s116, 0
    %p119 = scmp.eq.s32.totalorder 0, 0
    // Predicated region
    $region22: #{tpu_custom_call.1} parent=1 // pred_check
      %p120 = pneg %p119
    $region23: #{tpu_custom_call.1} parent=1 // pred_check_branch
      %122 = sbr.rel (%p120) target = $region25
    $region24: #{tpu_custom_call.1} parent=1 // pred_region
      %vm123 = vcmask 7168
      %124 = vst.msk [vmem:[#allocation2] sm:$0xff] %vm123, 0.0
      %125 = vst.msk [vmem:[#allocation3] sm:$0xff] %vm123, 0.0
    $region25: #{tpu_custom_call.1} parent=1 // pred_fallthru
      _
    %s126 = sadd.s32 0, 0
    %s127 = smul.u32 %s126, 8
    %v128 = vlaneseq
    %v129 = vshrl.u32 %v128, 7
    %v130 = vstv %s127
    %v131 = vadd.s32 %v130, %v129
    %vm132 = vcmp.lt.s32.totalorder %v131, 8
    %v133 = vld [vmem:[%s92] sm:$0xff]
    %v134 = vsel %vm132, 1, 0
    %vm135 = vcmp.eq.s32.totalorder %v134, 1
    %v136 = vsel %vm135, %v133, 0.0
    %v137 = vld [vmem:[#allocation4] sm:$0xff]
    %v138 = vsel %vm135, %v137, 0.0
    %v139 = vld [vmem:[%s105] sm:$0xff]
    %v140 = vsel %vm135, %v139, 0.0
    %141 = vmax.xlane.f32.xlu0 %v138
    %v142 = vpop.xlane.xlu0 %141
    %v143 = vsub.f32 %v138, %v142
    %v144 = vmul.f32 %v143, 1.442695
    %v145 = vpow.pop %v144
    %146 = vadd.xlane.f32.xlu0 %v145
    %v147 = vpop.xlane.xlu0 %146
    %v148 = vlog2.pop %v147
    %v149 = vmul.f32 %v148, 0.6931472
    %v150 = vsub.f32 %v143, %v149
    %v151 = vrcp.pop %v147
    %v152 = vmul.f32 1.0, %v151
    %v153 = vmul.f32 %v145, %v152
    %154 = vmax.xlane.f32.xlu0 %v140
    %v155 = vpop.xlane.xlu0 %154
    %v156 = vsub.f32 %v140, %v155
    %v157 = vmul.f32 %v156, 1.442695
    %v158 = vpow.pop %v157
    %159 = vadd.xlane.f32.xlu0 %v158
    %v160 = vpop.xlane.xlu0 %159
    %v161 = vlog2.pop %v160
    %v162 = vmul.f32 %v161, 0.6931472
    %v163 = vsub.f32 %v156, %v162
    %v164 = vrcp.pop %v160
    %v165 = vmul.f32 1.0, %v164
    %v166 = vmul.f32 %v158, %v165
    %v167 = vsub.f32 %v166, %v153
    %v168 = vsub.f32 %v163, %v150
    %v169 = vmul.f32 %v167, %v168
    %170 = vadd.xlane.f32.xlu0 %v169
    %v171 = vpop.xlane.xlu0 %170
    %vm172 = vcmask 130048
    %v173 = vsel %vm172, %v136, -inf
    %174 = vmax.xlane.f32.xlu0 %v173
    %v175 = vpop.xlane.xlu0 %174
    %v176 = vsub.f32 %v136, %v175
    %v177 = vmul.f32 %v176, 1.442695
    %v178 = vpow.pop %v177
    %v179 = vsel %vm172, %v178, 0.0
    %180 = vadd.xlane.f32.xlu0 %v179
    %v181 = vpop.xlane.xlu0 %180
    %v182 = vlog2.pop %v181
    %v183 = vmul.f32 %v182, 0.6931472
    %v184 = vsub.f32 %v176, %v183
    %v185 = vlaneseq
    %v186 = vand.u32 %v185, 127
    %v187 = vld [vmem:[%s115] sm:$0xff]
    %188 = vset.pattern.permute.xlu0 0
    %189 = vperm.xlu0 %188, %v187
    %v190 = vpop.permute.xlu0 %189
    %vm191 = vcmp.eq.s32.totalorder %v186, %v190
    %vm192 = vmand %vm135, %vm191
    %v193 = vsel %vm192, 1.0, 0.0
    %v194 = vmul.f32 %v193, %v184
    %v195 = vsel %vm172, %v194, 0.0
    %196 = vadd.xlane.f32.xlu0 %v195
    %v197 = vpop.xlane.xlu0 %196
    %v198 = vsub.f32 0.0, %v197
    %v199 = vld [vmem:[#allocation2] sm:$0xff]
    %v200 = vadd.f32 %v199, %v171
    %vm201 = vcmask 7168
    %202 = vst.msk [vmem:[#allocation2] sm:$0xff] %vm201, %v200
    %v203 = vld [vmem:[#allocation3] sm:$0xff]
    %v204 = vadd.f32 %v203, %v198
    %205 = vst.msk [vmem:[#allocation3] sm:$0xff] %vm201, %v204
    // Predicated region
    $region26: #{tpu_custom_call.1} parent=1 // pred_check
      %p206 = pneg %p119
    $region27: #{tpu_custom_call.1} parent=1 // pred_check_branch
      %208 = sbr.rel (%p206) target = $region29
    $region28: #{tpu_custom_call.1} parent=1 // pred_region
      %v209 = vld [vmem:[#allocation2] sm:$0xff]
      %v210 = vsel %vm201, %v209, 0.0
      %211 = vadd.xlane.f32.xlu0 %v210
      %v212 = vpop.xlane.xlu0 %211
      %v213 = vrot.slane %v212, 4
      %v214 = vadd.f32 %v212, %v213
      %v215 = vrot.slane %v214, 2
      %v216 = vadd.f32 %v214, %v215
      %v217 = vrot.slane %v216, 1
      %v218 = vadd.f32 %v216, %v217
      %s219 = vtos %v218
      %s220 = smul.f32 %s219, 0.00048828125
      %v221 = vld [vmem:[#allocation3] sm:$0xff]
      %v222 = vsel %vm201, %v221, 0.0
      %223 = vadd.xlane.f32.xlu0 %v222
      %v224 = vpop.xlane.xlu0 %223
      %v225 = vrot.slane %v224, 4
      %v226 = vadd.f32 %v224, %v225
      %v227 = vrot.slane %v226, 2
      %v228 = vadd.f32 %v226, %v227
      %v229 = vrot.slane %v228, 1
      %v230 = vadd.f32 %v228, %v229
      %s231 = vtos %v230
      %s232 = smul.f32 %s231, 0.125
      %s233 = sadd.f32 %s220, %s232
      %s234 = scalar_lea.smem [#allocation7], 0
      %235 = sst [smem:[%s234]] %s233
    $region29: #{tpu_custom_call.1} parent=1 // pred_fallthru
      _
    // Predicated region
    $region30: #{tpu_custom_call.1} parent=1 // pred_check
      _
    $region31: #{tpu_custom_call.1} parent=1 // pred_check_branch
      %237 = sbr.rel (0) target = $region33
    $region32: #{tpu_custom_call.1} parent=1 // pred_region
      %s239 = ssub.s32 16, 16
      %240 = vsyncadd [#allocation6], %s239
      %243 = dma.smem_to_hbm [#allocation7], 16, %s4, [#allocation6]
    $region33: #{tpu_custom_call.1} parent=1 // pred_fallthru
      _
    // Predicated region
    $region34: #{tpu_custom_call.1} parent=1 // pred_check
      _
    $region35: #{tpu_custom_call.1} parent=1 // pred_check_branch
      %245 = sbr.rel (0) target = $region37
    $region36: #{tpu_custom_call.1} parent=1 // pred_region
      %246 = dma.done [#allocation6], 16
    $region37: #{tpu_custom_call.1} parent=1 // pred_fallthru
      _
    %247 = sfence
    %248 = vsyncpa [#allocation5], 1
    %249 = vsyncpa [#allocation6], 1

</llo_original>
